<compile_context>
chip_gen: v5e
topology: v5e:2x2
jax: 0.10.0
libtpu: 0.0.40
codegen_flags: <defaults>
</compile_context>

<pallas_src>
import functools

import jax
import jax.numpy as jnp
from jax.experimental import pallas as pl
from jax.experimental.pallas import tpu as pltpu


# ----------------------------------------------------------------------------
# Kernel 1: fused QKV projection.
# ----------------------------------------------------------------------------
def _qkv_proj_kernel(x_ref, w_ref, b_ref, qkv_ref):
    # x block: (1, TS, E) bf16; w block: (E, 3E) bf16; b block: (1, 3E) f32.
    x = x_ref[0]                                               # (TS, E)
    acc = jnp.dot(x, w_ref[...], preferred_element_type=jnp.float32)
    acc = acc + b_ref[0]                                       # f32 bias add
    qkv_ref[0] = acc.astype(qkv_ref.dtype)                     # store bf16


# ----------------------------------------------------------------------------
# Kernel 2: flash-style attention (online softmax over KV tiles).
# Grid: (B, H, nQ, nKV); KV axis is last + "arbitrary"; output block index is
# constant across KV so the output tile stays resident until the final step.
# ----------------------------------------------------------------------------
def _flash_attn_kernel(q_ref, k_ref, v_ref, o_ref, m_ref, l_ref, acc_ref):
    kv = pl.program_id(3)

    @pl.when(kv == 0)
    def _init():
        m_ref[...] = jnp.full(m_ref.shape, -jnp.inf, jnp.float32)
        l_ref[...] = jnp.zeros(l_ref.shape, jnp.float32)
        acc_ref[...] = jnp.zeros(acc_ref.shape, jnp.float32)

    q = q_ref[0, 0]                                            # (TQ, hd) bf16
    k = k_ref[0, 0]                                            # (TKV, hd) bf16
    v = v_ref[0, 0]                                            # (TKV, hd) bf16

    # Q.K^T contracts the last dim of both operands (no transpose needed).
    # NOTE: no 1/sqrt(head_dim) scale — matches the reference module.
    s = jnp.einsum('qd,kd->qk', q, k,
                   preferred_element_type=jnp.float32)         # (TQ, TKV) f32

    m_prev = m_ref[...]
    m_new = jnp.maximum(m_prev, s.max(axis=-1, keepdims=True))
    alpha = jnp.exp(m_prev - m_new)                            # rescale factor
    p = jnp.exp(s - m_new)                                     # f32 softmax numerator

    l_ref[...] = alpha * l_ref[...] + p.sum(axis=-1, keepdims=True)
    acc_ref[...] = alpha * acc_ref[...] + jnp.dot(
        p.astype(v.dtype), v, preferred_element_type=jnp.float32)
    m_ref[...] = m_new

    @pl.when(kv == pl.num_programs(3) - 1)
    def _finalize():
        inv_l = pl.reciprocal(l_ref[...], approx=True)         # EUP reciprocal
        o_ref[0, 0] = (acc_ref[...] * inv_l).astype(o_ref.dtype)


# ----------------------------------------------------------------------------
# Wrapper.
# ----------------------------------------------------------------------------
def self_attention(x, wq, wk, wv, bq, bk, bv, *, num_heads,
                   s_tile=256, q_tile=256, kv_tile=512):
    """x: (B, S, E); w*: (E, E) input-major (== W_pt.T); b*: (E,).

    Returns (B, S, E) in x.dtype. Weights/activations for the MXU matmuls are
    cast to bf16 (bf16-native MXU on v5e/v6e/v7x); accumulation and softmax
    stay in f32.
    """
    B, S, E = x.shape
    hd = E // num_heads
    assert hd * num_heads == E, "embed_dim must be divisible by num_heads"

    cdt = jnp.bfloat16  # MXU operand dtype on all generations

    # Fuse the three projections once on the host; store bf16 (halves DMA).
    wqkv = jnp.concatenate([wq, wk, wv], axis=1).astype(cdt)            # (E, 3E)
    bqkv = jnp.concatenate([bq, bk, bv]).reshape(1, 3 * E).astype(jnp.float32)
    x_c = x.astype(cdt)

    # ---- Kernel 1: QKV projection -----------------------------------------
    TS = min(s_tile, S)
    assert S % TS == 0, "S must be divisible by the projection row tile"
    qkv = pl.pallas_call(
        _qkv_proj_kernel,
        out_shape=jax.ShapeDtypeStruct((B, S, 3 * E), cdt),
        grid_spec=pltpu.PrefetchScalarGridSpec(
            num_scalar_prefetch=0,
            grid=(B, S // TS),
            in_specs=[
                pl.BlockSpec((1, TS, E), lambda b, s: (b, s, 0)),       # x
                # Invariant blocks (constant index_map -> not re-DMA'd per
                # step). TODO(synk): pipeline_mode=pl.Buffered(1) at prod E.
                pl.BlockSpec((E, 3 * E), lambda b, s: (0, 0)),          # Wqkv
                pl.BlockSpec((1, 3 * E), lambda b, s: (0, 0)),          # bqkv
            ],
            out_specs=pl.BlockSpec((1, TS, 3 * E), lambda b, s: (b, s, 0)),
        ),
        compiler_params=pltpu.CompilerParams(
            dimension_semantics=("parallel", "parallel")),
    )(x_c, wqkv, bqkv)

    # ---- XLA glue: split heads once in HBM, outside the attention loop ----
    q, k, v = jnp.split(qkv, 3, axis=-1)                                # (B,S,E)

    def to_heads(a):  # (B, S, E) -> (B, H, S, hd)
        return a.reshape(B, S, num_heads, hd).transpose(0, 2, 1, 3)

    q, k, v = to_heads(q), to_heads(k), to_heads(v)

    # ---- Kernel 2: flash attention -----------------------------------------
    TQ = min(q_tile, S)
    TKV = min(kv_tile, S)
    assert S % TQ == 0 and S % TKV == 0, "S must be divisible by TQ and TKV"

    o = pl.pallas_call(
        _flash_attn_kernel,
        out_shape=jax.ShapeDtypeStruct((B, num_heads, S, hd), x.dtype),
        grid_spec=pltpu.PrefetchScalarGridSpec(
            num_scalar_prefetch=0,
            grid=(B, num_heads, S // TQ, S // TKV),
            in_specs=[
                pl.BlockSpec((1, 1, TQ, hd),
                             lambda b, h, qi, ki: (b, h, qi, 0)),       # Q
                pl.BlockSpec((1, 1, TKV, hd),
                             lambda b, h, qi, ki: (b, h, ki, 0)),       # K
                pl.BlockSpec((1, 1, TKV, hd),
                             lambda b, h, qi, ki: (b, h, ki, 0)),       # V
            ],
            out_specs=pl.BlockSpec((1, 1, TQ, hd),
                                   lambda b, h, qi, ki: (b, h, qi, 0)),
            scratch_shapes=[
                pltpu.VMEM((TQ, 1), jnp.float32),    # running max m
                pltpu.VMEM((TQ, 1), jnp.float32),    # running sum l
                pltpu.VMEM((TQ, hd), jnp.float32),   # output accumulator
            ],
        ),
        compiler_params=pltpu.CompilerParams(
            # b / h / q-tiles are parallel (v7x megacore can shard on any of
            # them, so odd B is fine); the KV axis is the reduction.
            dimension_semantics=("parallel", "parallel", "parallel",
                                 "arbitrary"),
            # Safe on every generation's scoped default; re-derive from TQ/TKV
            # for production sizes (v7x has only 64 MiB physical VMEM).
            vmem_limit_bytes=32 * 1024 * 1024,
        ),
    )(q, k, v)

    # (B, H, S, hd) -> (B, S, E), same as torch permute(0,2,1,3).view(...).
    return o.transpose(0, 2, 1, 3).reshape(B, S, E)


# ----------------------------------------------------------------------------
# Pure-JAX reference mirroring the PyTorch forward exactly (f32).
# ----------------------------------------------------------------------------
def self_attention_ref(x, wq, wk, wv, bq, bk, bv, *, num_heads):
    B, S, E = x.shape
    hd = E // num_heads
    q = x @ wq + bq
    k = x @ wk + bk
    v = x @ wv + bv
    q = q.reshape(B, S, num_heads, hd).transpose(0, 2, 1, 3)
    k = k.reshape(B, S, num_heads, hd).transpose(0, 2, 1, 3)
    v = v.reshape(B, S, num_heads, hd).transpose(0, 2, 1, 3)
    energy = jnp.einsum('bhqd,bhkd->bhqk', q, k)   # no 1/sqrt(hd) scale
    attn = jax.nn.softmax(energy, axis=-1)
    out = jnp.einsum('bhqk,bhkd->bhqd', attn, v)
    return out.transpose(0, 2, 1, 3).reshape(B, S, E)


if __name__ == "__main__":
    # Small shapes consistent with the module: batch=2, seq=8, embed=32, heads=4.
    B, S, E, H = 2, 8, 32, 4

    key = jax.random.PRNGKey(0)
    kx, kq, kk, kv, kbq, kbk, kbv = jax.random.split(key, 7)

    x = jax.random.normal(kx, (B, S, E), dtype=jnp.float32)
    scale = 1.0 / jnp.sqrt(E)
    wq = jax.random.uniform(kq, (E, E), jnp.float32, -scale, scale)
    wk = jax.random.uniform(kk, (E, E), jnp.float32, -scale, scale)
    wv = jax.random.uniform(kv, (E, E), jnp.float32, -scale, scale)
    bq = jax.random.uniform(kbq, (E,), jnp.float32, -scale, scale)
    bk = jax.random.uniform(kbk, (E,), jnp.float32, -scale, scale)
    bv = jax.random.uniform(kbv, (E,), jnp.float32, -scale, scale)

    out = self_attention(x, wq, wk, wv, bq, bk, bv, num_heads=H)
    out = jax.block_until_ready(out)

    ref = self_attention_ref(x, wq, wk, wv, bq, bk, bv, num_heads=H)
    assert out.shape == (B, S, E)
    # Tolerance accounts for the bf16 MXU operand path (weights/activations
    # quantized to bf16, f32 accumulation) and the approximate EUP reciprocal
    # in the softmax normalization.
    assert jnp.allclose(out, ref, atol=5e-2, rtol=5e-2), "mismatch vs reference"

    print("KERNEL_OK")
</pallas_src>

<mosaic_0001>
module attributes {stable_mosaic.version = 11 : i64} {
  func.func @_qkv_proj_kernel(%arg0: i32, %arg1: i32, %arg2: memref<1x8x32xbf16, #tpu.memory_space<vmem>>, %arg3: memref<32x96xbf16, #tpu.memory_space<vmem>>, %arg4: memref<1x96xf32, #tpu.memory_space<vmem>>, %arg5: memref<1x8x96xbf16, #tpu.memory_space<vmem>>) attributes {dimension_semantics = [#tpu.dimension_semantics<parallel>, #tpu.dimension_semantics<parallel>], iteration_bounds = array<i64: 2, 1>, scalar_prefetch = 0 : i64, scratch_operands = 0 : i64, tpu.core_type = #tpu.core_type<tc>, window_params = [{transform_indices = @transform_0, window_bounds = array<i64: 1, 8, 32>}, {pipeline_mode = #tpu.pipeline_mode<synchronous>, transform_indices = @transform_1, window_bounds = array<i64: 32, 96>}, {pipeline_mode = #tpu.pipeline_mode<synchronous>, transform_indices = @transform_2, window_bounds = array<i64: 1, 96>}, {transform_indices = @transform_3, window_bounds = array<i64: 1, 8, 96>}]} {
    %c0 = arith.constant 0 : index
    %c0_0 = arith.constant 0 : index
    %c0_1 = arith.constant 0 : index
    %0 = vector.load %arg2[%c0, %c0_0, %c0_1] : memref<1x8x32xbf16, #tpu.memory_space<vmem>>, vector<1x8x32xbf16>
    %1 = vector.shape_cast %0 : vector<1x8x32xbf16> to vector<8x32xbf16>
    %c0_2 = arith.constant 0 : index
    %c0_3 = arith.constant 0 : index
    %2 = vector.load %arg3[%c0_2, %c0_3] : memref<32x96xbf16, #tpu.memory_space<vmem>>, vector<32x96xbf16>
    %cst = arith.constant dense<0.000000e+00> : vector<8x96xf32>
    %3 = tpu.matmul %1, %2, %cst {dimension_numbers = #tpu.dot_dimension_numbers<[1], [0], [0], [1], [0, 0, 1, 1], [], []>} : vector<8x32xbf16>, vector<32x96xbf16>, vector<8x96xf32> -> vector<8x96xf32>
    %c0_4 = arith.constant 0 : index
    %c0_5 = arith.constant 0 : index
    %4 = vector.load %arg4[%c0_4, %c0_5] : memref<1x96xf32, #tpu.memory_space<vmem>>, vector<1x96xf32>
    %5 = vector.shape_cast %4 : vector<1x96xf32> to vector<96xf32>
    %6 = vector.shape_cast %5 : vector<96xf32> to vector<1x96xf32>
    %7 = vector.broadcast %6 : vector<1x96xf32> to vector<8x96xf32>
    %8 = arith.addf %3, %7 : vector<8x96xf32>
    %9 = arith.truncf %8 : vector<8x96xf32> to vector<8x96xbf16>
    %c0_6 = arith.constant 0 : index
    %c0_7 = arith.constant 0 : index
    %c0_8 = arith.constant 0 : index
    %10 = vector.load %arg5[%c0_6, %c0_7, %c0_8] : memref<1x8x96xbf16, #tpu.memory_space<vmem>>, vector<1x8x96xbf16>
    %11 = vector.shape_cast %10 : vector<1x8x96xbf16> to vector<8x96xbf16>
    %12 = vector.shape_cast %9 : vector<8x96xbf16> to vector<1x8x96xbf16>
    tpu.vector_store %arg5[%c0_6, %c0_7, %c0_8], %12 {strides = array<i32>} : memref<1x8x96xbf16, #tpu.memory_space<vmem>>, vector<1x8x96xbf16>,
    return
  }
  func.func @transform_0(%arg0: i32, %arg1: i32) -> (i32, i32, i32) {
    %c0_i32 = arith.constant 0 : i32
    %c0_i32_0 = arith.constant 0 : i32
    return %arg0, %arg1, %c0_i32 : i32, i32, i32
  }
  func.func @transform_1(%arg0: i32, %arg1: i32) -> (i32, i32) {
    %c0_i32 = arith.constant 0 : i32
    %c0_i32_0 = arith.constant 0 : i32
    %c0_i32_1 = arith.constant 0 : i32
    return %c0_i32, %c0_i32_0 : i32, i32
  }
  func.func @transform_2(%arg0: i32, %arg1: i32) -> (i32, i32) {
    %c0_i32 = arith.constant 0 : i32
    %c0_i32_0 = arith.constant 0 : i32
    %c0_i32_1 = arith.constant 0 : i32
    return %c0_i32, %c0_i32_0 : i32, i32
  }
  func.func @transform_3(%arg0: i32, %arg1: i32) -> (i32, i32, i32) {
    %c0_i32 = arith.constant 0 : i32
    %c0_i32_0 = arith.constant 0 : i32
    return %arg0, %arg1, %c0_i32 : i32, i32, i32
  }
}

</mosaic_0001>

<llo_original>
// kernel: tpu_custom_call.1
$region0: #{tpu_custom_call.1}
  #allocation0 [shape = 'u32[]', space=smem, size = 0x4, offset = 0x4, fixed_abs, tag = 'smem constant byte address 0x4 - core index']
  #allocation1 [shape = 'u32[72,128]{1,0:T(1,128)}', space=vmem, size = 0x9000, scoped, tag = 'internal scratch']
  %s0 = inlined_call_operand.hbm [shape: bf16[2,8,32], index: 0, kind: input, shape index: {}]
  %s1 = inlined_call_operand.hbm [shape: bf16[32,96], index: 1, kind: input, shape index: {}]
  %s2 = inlined_call_operand.vmem [shape: f32[1,96], index: 2, kind: input, shape index: {}]
  %s3 = inlined_call_operand.hbm [shape: bf16[2,8,96], index: 3, kind: output, shape index: {}]
  %s4 = sld [smem:[#allocation0]]
  $region53: #{tpu_custom_call.1} parent=0
    _
  %s6 = ssub.s32 1, %s4
  %s7 = scalar_select 0, %s6, %s4
  $region1: #{tpu_custom_call.1} parent=0
    #allocation2 [shape = 'u8[4096]{0}', space=vmem, size = 0x1000, scoped, tag = 'input window, operand 0']
    #allocation3 [shape = 's32[2]{0}', space=sflag, size = 0x8, scoped, tag = 'scoped memory for tpu_custom_call.1']
    #allocation4 [shape = 's32[2]{0}', space=sflag, size = 0x8, scoped, tag = 'scoped memory for tpu_custom_call.1']
    #allocation5 [shape = 'u8[8192]{0}', space=vmem, size = 0x2000, scoped, tag = 'input window, operand 1, single buffered']
    #allocation6 [shape = 's32[1]{0}', space=sflag, size = 0x4, scoped, tag = 'scoped memory for tpu_custom_call.1']
    #allocation7 [shape = 'u8[4096]{0}', space=vmem, size = 0x1000, scoped, tag = 'output window, operand 0']
    %8 = vsyncpa [#allocation3], 0
    %s9 = scalar_lea.sflag [#allocation3], 1
    %10 = vsyncpa %s9, 0
    %11 = vsyncpa [#allocation6], 0
    %12 = vsyncpa [#allocation4], 0
    %s13 = scalar_lea.sflag [#allocation4], 1
    %14 = vsyncpa %s13, 0
    loop: start=0, step=1, limit=4
    $region2: #{tpu_custom_call.1} parent=1 // loop_pre_header
      _
    $region3: #{tpu_custom_call.1} parent=1 // loop_header
      %s16 = sphi 0, %s20
      %p17 = scmp.ge.s32.totalorder %s16, 4
      %s23 = sphi 0, %s35
      %s24 = sphi 0, %s31
      %s25 = sphi 0, %s23
      %s26 = sphi 0, %s24
      %s27 = sphi 0, %s25
      %s28 = sphi 0, %s26
      %s40 = sphi 0, %s42
      %s43 = sphi 0, %s40
      %s44 = sphi 0, %s43
      %s60 = sphi 0, %s44
      %s64 = sphi 0, %s64
      %s66 = sphi 0, %s64
      %s67 = sphi 0, %s66
      %s81 = sphi 0, %s67
      %s85 = sphi 0, %s85
      %s87 = sphi 0, %s85
      %s88 = sphi 0, %s87
      %s102 = sphi 0, %s88
      %s110 = sphi 0, %s112
      %s113 = sphi 0, %s110
      %s114 = sphi 0, %s113
      %s130 = sphi 0, %s114
    $region4: #{tpu_custom_call.1} parent=1 // loop_header_branch
      %19 = sbr.rel (%p17) target = $region8
    $region5: #{tpu_custom_call.1} parent=1 // loop_body
      %s21 = ssub.s32 %s16, 1
      %s22 = ssub.s32 %s16, 2
      %s29 = sadd.s32 1, %s24
      %p30 = scmp.ge.s32.totalorder %s29, 1
      %s31 = scalar_select %p30, 0, %s29
      %s32 = sadd.s32 1, %s23
      %s33 = scalar_select %p30, %s32, %s23
      %p34 = scmp.ge.s32.totalorder %s33, 2
      %s35 = scalar_select %p34, 0, %s33
      %s36 = ssub.s32 %s23, %s35
      %s37 = ssub.s32 %s24, %s31
      %s38 = sor.u32 %s36, %s37
      %p39 = scmp.eq.s32.totalorder %s38, 0
      %s41 = sadd.s32 %s40, 1
      %s42 = scalar_select %p39, %s40, %s41
      %p45 = pneg %p39
      %p46 = scmp.eq.s32.totalorder %s16, 1
      %p47 = por %p45, %p46
      %p48 = scmp.ne.s32.totalorder %s40, %s43
      %p49 = scmp.eq.s32.totalorder %s16, 0
      %p50 = por %p48, %p49
      %p51 = scmp.ne.s32.totalorder %s40, %s43
      %p52 = scmp.eq.s32.totalorder %s21, 1
      %p53 = por %p51, %p52
      %p54 = scmp.ne.s32.totalorder %s43, %s44
      %p55 = scmp.eq.s32.totalorder %s21, 0
      %p56 = por %p54, %p55
      %p57 = scmp.ne.s32.totalorder %s43, %s44
      %p58 = scmp.eq.s32.totalorder %s22, 1
      %p59 = por %p57, %p58
      %p61 = scmp.ne.s32.totalorder %s44, %s60
      %p62 = scmp.eq.s32.totalorder %s22, 0
      %p63 = por %p61, %p62
      %s65 = sadd.s32 %s64, 1
      %p68 = scmp.eq.s32.totalorder %s16, 1
      %p69 = scmp.ne.s32.totalorder %s64, %s66
      %p70 = scmp.eq.s32.totalorder %s16, 0
      %p71 = por %p69, %p70
      %p72 = scmp.ne.s32.totalorder %s64, %s66
      %p73 = scmp.eq.s32.totalorder %s21, 1
      %p74 = por %p72, %p73
      %p75 = scmp.ne.s32.totalorder %s66, %s67
      %p76 = scmp.eq.s32.totalorder %s21, 0
      %p77 = por %p75, %p76
      %p78 = scmp.ne.s32.totalorder %s66, %s67
      %p79 = scmp.eq.s32.totalorder %s22, 1
      %p80 = por %p78, %p79
      %p82 = scmp.ne.s32.totalorder %s67, %s81
      %p83 = scmp.eq.s32.totalorder %s22, 0
      %p84 = por %p82, %p83
      %s86 = sadd.s32 %s85, 1
      %p89 = scmp.eq.s32.totalorder %s16, 1
      %p90 = scmp.ne.s32.totalorder %s85, %s87
      %p91 = scmp.eq.s32.totalorder %s16, 0
      %p92 = por %p90, %p91
      %p93 = scmp.ne.s32.totalorder %s85, %s87
      %p94 = scmp.eq.s32.totalorder %s21, 1
      %p95 = por %p93, %p94
      %p96 = scmp.ne.s32.totalorder %s87, %s88
      %p97 = scmp.eq.s32.totalorder %s21, 0
      %p98 = por %p96, %p97
      %p99 = scmp.ne.s32.totalorder %s87, %s88
      %p100 = scmp.eq.s32.totalorder %s22, 1
      %p101 = por %p99, %p100
      %p103 = scmp.ne.s32.totalorder %s88, %s102
      %p104 = scmp.eq.s32.totalorder %s22, 0
      %p105 = por %p103, %p104
      %s106 = ssub.s32 %s23, %s35
      %s107 = ssub.s32 %s24, %s31
      %s108 = sor.u32 %s106, %s107
      %p109 = scmp.eq.s32.totalorder %s108, 0
      %s111 = sadd.s32 %s110, 1
      %s112 = scalar_select %p109, %s110, %s111
      %p115 = pneg %p109
      %p116 = scmp.eq.s32.totalorder %s16, 1
      %p117 = por %p115, %p116
      %p118 = scmp.ne.s32.totalorder %s110, %s113
      %p119 = scmp.eq.s32.totalorder %s16, 0
      %p120 = por %p118, %p119
      %p121 = scmp.ne.s32.totalorder %s110, %s113
      %p122 = scmp.eq.s32.totalorder %s21, 1
      %p123 = por %p121, %p122
      %p124 = scmp.ne.s32.totalorder %s113, %s114
      %p125 = scmp.eq.s32.totalorder %s21, 0
      %p126 = por %p124, %p125
      %p127 = scmp.ne.s32.totalorder %s113, %s114
      %p128 = scmp.eq.s32.totalorder %s22, 1
      %p129 = por %p127, %p128
      %p131 = scmp.ne.s32.totalorder %s114, %s130
      %p132 = scmp.eq.s32.totalorder %s22, 0
      %p133 = por %p131, %p132
      %p134 = scmp.le.s32.totalorder 1, %s16
      %p135 = scmp.lt.s32.totalorder %s16, 3
      %p136 = pnand %p134, %p135
      %p137 = pneg %p136
      // Predicated region
      $region9: #{tpu_custom_call.1} parent=5 // pred_check
        _
      $region10: #{tpu_custom_call.1} parent=5 // pred_check_branch
        %139 = sbr.rel (%p136) target = $region12
      $region11: #{tpu_custom_call.1} parent=5 // pred_region
        %s140 = ssub.s32 %s16, 1
        // Predicated region
        $region13: #{tpu_custom_call.1} parent=11 // pred_check
          %p141 = pneg %p77
        $region14: #{tpu_custom_call.1} parent=11 // pred_check_branch
          %143 = sbr.rel (%p141) target = $region16
        $region15: #{tpu_custom_call.1} parent=11 // pred_region
          %145 = vsyncadd [#allocation6], 0
          %s146 = sshll.u32 %s1, 4
          %s147 = int_to_ptr.hbm [resolvable:$true] %s146
          %s148 = sshll.u32 [#allocation5], 4
          %s149 = int_to_ptr.vmem [resolvable:$true] %s148
          %154 = dma.hbm_to_vmem [thread:$0]  %s147, 256, %s149, [#allocation6], 64, 64, 4
        $region16: #{tpu_custom_call.1} parent=11 // pred_fallthru
          _
        // Predicated region
        $region17: #{tpu_custom_call.1} parent=11 // pred_check
          %p155 = pneg %p98
        $region18: #{tpu_custom_call.1} parent=11 // pred_check_branch
          %157 = sbr.rel (%p155) target = $region20
        $region19: #{tpu_custom_call.1} parent=11 // pred_region
          _
        $region20: #{tpu_custom_call.1} parent=11 // pred_fallthru
          _
      $region12: #{tpu_custom_call.1} parent=5 // pred_fallthru
        _
      %p158 = scmp.lt.s32.totalorder %s16, 2
      // Predicated region
      $region21: #{tpu_custom_call.1} parent=5 // pred_check
        %p159 = pneg %p158
      $region22: #{tpu_custom_call.1} parent=5 // pred_check_branch
        %161 = sbr.rel (%p159) target = $region24
      $region23: #{tpu_custom_call.1} parent=5 // pred_region
        // Predicated region
        $region25: #{tpu_custom_call.1} parent=23 // pred_check
          %p162 = pneg %p50
        $region26: #{tpu_custom_call.1} parent=23 // pred_check_branch
          %164 = sbr.rel (%p162) target = $region28
        $region27: #{tpu_custom_call.1} parent=23 // pred_region
          %s165 = sand.u32 %s40, 1
          %s166 = scalar_lea.sflag [#allocation3], %s165
          %s167 = sand.u32 %s40, 1
          %s168 = smul.addr %s167, 4
          %s169 = scalar_lea.vmem [#allocation2], %s168
          %171 = vsyncadd %s166, 0
          %s172 = sadd.s32 %s24, %s23
          %s173 = smul.addr %s172, 4
          %s174 = scalar_lea.hbm %s0, %s173
          %s176 = sshll.u32 %s174, 4
          %s177 = int_to_ptr.hbm [resolvable:$true] %s176
          %s178 = sshll.u32 %s169, 4
          %s179 = int_to_ptr.vmem [resolvable:$true] %s178
          %181 = dma.hbm_to_vmem [thread:$0]  %s177, 64, %s179, %s166
        $region28: #{tpu_custom_call.1} parent=23 // pred_fallthru
          _
      $region24: #{tpu_custom_call.1} parent=5 // pred_fallthru
        _
      %p182 = scmp.le.s32.totalorder 1, %s16
      %p183 = scmp.lt.s32.totalorder %s16, 3
      %p184 = pnand %p182, %p183
      %p185 = pneg %p184
      // Predicated region
      $region29: #{tpu_custom_call.1} parent=5 // pred_check
        _
      $region30: #{tpu_custom_call.1} parent=5 // pred_check_branch
        %187 = sbr.rel (%p184) target = $region32
      $region31: #{tpu_custom_call.1} parent=5 // pred_region
        %s188 = ssub.s32 %s16, 1
        %s189 = sand.u32 %s43, 1
        %s190 = scalar_lea.sflag [#allocation3], %s189
        %s191 = sand.u32 %s43, 1
        %s192 = smul.addr %s191, 4
        %s193 = scalar_lea.vmem [#allocation2], %s192
        // Predicated region
        $region33: #{tpu_custom_call.1} parent=31 // pred_check
          %p194 = pneg %p56
        $region34: #{tpu_custom_call.1} parent=31 // pred_check_branch
          %196 = sbr.rel (%p194) target = $region36
        $region35: #{tpu_custom_call.1} parent=31 // pred_region
          %198 = dma.done %s190, 64
        $region36: #{tpu_custom_call.1} parent=31 // pred_fallthru
          _
        // Predicated region
        $region37: #{tpu_custom_call.1} parent=31 // pred_check
          %p199 = pneg %p77
        $region38: #{tpu_custom_call.1} parent=31 // pred_check_branch
          %201 = sbr.rel (%p199) target = $region40
        $region39: #{tpu_custom_call.1} parent=31 // pred_region
          %203 = dma.done [#allocation6], 256
        $region40: #{tpu_custom_call.1} parent=31 // pred_fallthru
          _
        %s204 = sand.u32 %s43, 1
        %s205 = scalar_lea.sflag [#allocation3], %s204
        %s206 = sand.u32 %s43, 1
        %s207 = smul.addr %s206, 4
        %s208 = scalar_lea.vmem [#allocation2], %s207
        %p209 = pneg %p56
        %p210 = pneg %p53
        %p211 = pneg %p77
        %p212 = pneg %p74
        %p213 = pneg %p98
        %p214 = pneg %p95
        %p215 = pneg %p126
        %p216 = pneg %p123
        %s217 = sand.u32 %s113, 1
        %s218 = scalar_lea.sflag [#allocation4], %s217
        %s219 = sand.u32 %s113, 1
        %s220 = smul.addr %s219, 4
        %s221 = scalar_lea.vmem [#allocation7], %s220
        %v223 = vld [vmem:[%s193] sm:$0xf]
        %v224 = vld [vmem:[#allocation5] sm:$0xf]
        %v225 = vld [vmem:[#allocation5 + $0x4] sm:$0xf]
        %v226 = vld [vmem:[#allocation5 + $0x8] sm:$0xf]
        %v227 = vld [vmem:[#allocation5 + $0xc] sm:$0xf]
        %v228 = vld [vmem:[%s2] sm:$0x1]
        %v230 = vperm.slane %v228, 0
        %v236 = vunpack.c.l.b16 %v224
        %v237 = vunpack.c.l.b16 %v225
        %v238 = vunpack.c.l.b16 %v226
        %v239 = vunpack.c.l.b16 %v227
        %v240 = vpack.c.b16 %v237, %v236
        %v241 = vpack.c.b16 %v239, %v238
        %vm244 = vcmask 261120
        %v246 = vsel %vm244, %v223, 0
        %248 = vmatpush.bf16.msra.mxu0 0
        %249 = vmatpush.bf16.msra.mxu0 0
        %250 = vmatpush.bf16.msra.mxu0 0
        %251 = vmatpush.bf16.msra.mxu0 0
        %252 = vmatpush.bf16.msra.mxu0 0
        %253 = vmatpush.bf16.msra.mxu0 0
        %254 = vmatpush.bf16.msra.mxu0 %v241
        %255 = vmatpush.bf16.msra.mxu0 %v240
        %256 = vmatmul.bf16.gmra.mxu0 %v246
        %v257 = vpop.f32.mrf.mxu0
        %v258 = vadd.f32 %v230, %v257
        %v259 = vpop.f32.mrf.mxu0
        %260 = vdwg.mxu0
        %v261 = vpack.c.bf16 %v258, %v258
        %vm262 = vcmask 781312
        %263 = vst.msk [vmem:[%s221] sm:$0xf] %vm262, %v261
        %s264 = sand.u32 %s113, 1
        %s265 = scalar_lea.sflag [#allocation4], %s264
        %s266 = sand.u32 %s113, 1
        %s267 = smul.addr %s266, 4
        %s268 = scalar_lea.vmem [#allocation7], %s267
        // Predicated region
        $region41: #{tpu_custom_call.1} parent=31 // pred_check
          %p269 = pneg %p123
        $region42: #{tpu_custom_call.1} parent=31 // pred_check_branch
          %271 = sbr.rel (%p269) target = $region44
        $region43: #{tpu_custom_call.1} parent=31 // pred_region
          %273 = vsyncadd %s265, 0
          %s274 = sadd.s32 %s26, %s25
          %s275 = smul.addr %s274, 4
          %s276 = scalar_lea.hbm %s3, %s275
          %s278 = sshll.u32 %s268, 4
          %s279 = int_to_ptr.vmem [resolvable:$true] %s278
          %s280 = sshll.u32 %s276, 4
          %s281 = int_to_ptr.hbm [resolvable:$true] %s280
          %283 = dma.vmem_to_hbm [thread:$0]  %s279, 64, %s281, %s265
        $region44: #{tpu_custom_call.1} parent=31 // pred_fallthru
          _
      $region32: #{tpu_custom_call.1} parent=5 // pred_fallthru
        _
      %p284 = scmp.le.s32.totalorder 2, %s16
      // Predicated region
      $region45: #{tpu_custom_call.1} parent=5 // pred_check
        %p285 = pneg %p284
      $region46: #{tpu_custom_call.1} parent=5 // pred_check_branch
        %287 = sbr.rel (%p285) target = $region48
      $region47: #{tpu_custom_call.1} parent=5 // pred_region
        %s288 = ssub.s32 %s16, 2
        // Predicated region
        $region49: #{tpu_custom_call.1} parent=47 // pred_check
          %p289 = pneg %p129
        $region50: #{tpu_custom_call.1} parent=47 // pred_check_branch
          %291 = sbr.rel (%p289) target = $region52
        $region51: #{tpu_custom_call.1} parent=47 // pred_region
          %s292 = sand.u32 %s114, 1
          %s293 = scalar_lea.sflag [#allocation4], %s292
          %s294 = sand.u32 %s114, 1
          %s295 = smul.addr %s294, 4
          %s296 = scalar_lea.vmem [#allocation7], %s295
          %298 = dma.done %s293, 64
        $region52: #{tpu_custom_call.1} parent=47 // pred_fallthru
          _
      $region48: #{tpu_custom_call.1} parent=5 // pred_fallthru
        _
    $region6: #{tpu_custom_call.1} parent=1 // loop_footer
      %s20 = sadd.s32 1, %s16
    $region7: #{tpu_custom_call.1} parent=1 // loop_footer_branch
      %15 = sbr.rel target = $region3
    $region8: #{tpu_custom_call.1} parent=1 // loop_exit
      _
    %299 = vsyncpa [#allocation3], 1
    %s300 = scalar_lea.sflag [#allocation3], 1
    %301 = vsyncpa %s300, 1
    %302 = vsyncpa [#allocation6], 1
    %303 = vsyncpa [#allocation4], 1
    %s304 = scalar_lea.sflag [#allocation4], 1
    %305 = vsyncpa %s304, 1

</llo_original>
